<compile_context>
chip_gen: v7x
topology: tpu7x:2x2x1
jax: 0.10.0
libtpu: 0.0.40
codegen_flags: <defaults>
</compile_context>

<pallas_src>
import jax
import jax.numpy as jnp
from jax.experimental import pallas as pl
from jax.experimental.pallas import tpu as pltpu


# ----------------------------------------------------------------------------
# Pallas kernel: unmasked lane-dense store of one batch slab (pure broadcast)
# ----------------------------------------------------------------------------
def _pos_broadcast_kernel(core_ref, o_ref):
    # core_ref: (3S, TM)  -- lane-dense per-channel pattern tile (fetched once)
    # o_ref:    (3S, TM)  -- one (batch, lane-tile) slab of the flattened output
    o_ref[...] = core_ref[...]


def _pick_lane_tile(M, rows, max_block_bytes=4 * 1024 * 1024):
    """Largest lane tile that is a multiple of 128, divides M, and fits VMEM.

    Falls back to the full axis when M is small or not 128-aligned (full-axis
    blocks are always legal).
    """
    full_bytes = rows * M * 4
    if full_bytes <= max_block_bytes or (M % 128) != 0:
        return M
    n = M // 128
    best = 128
    for d in range(1, n + 1):
        if n % d == 0:
            tm = 128 * d
            if rows * tm * 4 <= max_block_bytes and tm > best:
                best = tm
    return best


def position_embedding_learned_pallas(x, col_w, row_w, temp_w):
    """Faithful forward of PositionEmbeddingLearned.

    x:      (b, d, t, h, w)  -- only the shape is used (as in the PyTorch module)
    col_w:  (50, num_pos_feats)    row_w: (50, num_pos_feats)
    temp_w: (20, num_pos_feats)
    returns pos: (b, 2*num_pos_feats + t, t, h, w)
    """
    b, _, t, h, w = x.shape
    npf = col_w.shape[1]
    # torch.cat(dim=1) in the original forward only type-checks under this.
    assert t == h == w == npf, "original module requires t == h == w == num_pos_feats"
    S = npf
    C = 3 * S                    # output channels: 2*npf + t  (t == npf)
    M = t * h * w                # lane-dense flattened (d2, d3, d4) axis

    # Faithful index mapping of the PyTorch forward (no value depends on d2):
    #   pos[b, c,      d2, d3, d4] = col_w[d3, c]    for c in [0, S)
    #   pos[b, S + c,  d2, d3, d4] = row_w[d4, c]    for c in [0, S)
    #   pos[b, 2S + q, d2, d3, d4] = temp_w[q, d4]   for q in [0, t)
    col_sl = col_w[:w, :].astype(jnp.float32)     # (w, S)
    row_sl = row_w[:h, :].astype(jnp.float32)     # (h, S)
    temp_sl = temp_w[:t, :].astype(jnp.float32)   # (t, S)

    # Tiny (C, t, h, w) per-channel pattern == output / b.  Layout plumbing only.
    col_blk = jnp.broadcast_to(col_sl.T[:, None, :, None], (S, t, h, w))
    row_blk = jnp.broadcast_to(row_sl.T[:, None, None, :], (S, t, h, w))
    tmp_blk = jnp.broadcast_to(temp_sl[:, None, None, :], (t, t, h, w))  # S == w
    core = jnp.concatenate([col_blk, row_blk, tmp_blk], axis=0).reshape(C, M)

    TM = _pick_lane_tile(M, C)
    Mt = M // TM

    out_flat = pl.pallas_call(
        _pos_broadcast_kernel,
        out_shape=jax.ShapeDtypeStruct((b, C, M), jnp.float32),
        grid=(Mt, b),  # lane-tile axis OUTER so the core tile is DMA'd only once
        in_specs=[pl.BlockSpec((C, TM), lambda mi, bi: (0, mi))],
        out_specs=pl.BlockSpec((None, C, TM), lambda mi, bi: (bi, 0, mi)),
        compiler_params=pltpu.CompilerParams(
            dimension_semantics=("parallel", "parallel")),
    )(core)

    # Contiguous reshape back to the module's (b, C, t, h, w) layout (free).
    return out_flat.reshape(b, C, t, h, w)


# ----------------------------------------------------------------------------
# Pure-JAX reference: literal translation of the PyTorch forward
# ----------------------------------------------------------------------------
def position_embedding_learned_ref(x, col_w, row_w, temp_w):
    b, _, t, h, w = x.shape
    i = jnp.arange(w)
    j = jnp.arange(h)
    k = jnp.arange(t)

    x_emb = col_w[i]                                          # (w, npf)
    x_emb = jnp.tile(x_emb[:, None, :], (1, w, 1))            # (w, w, npf)
    x_emb = jnp.tile(x_emb[None], (t, 1, 1, 1))               # (t, w, w, npf)
    x_emb = jnp.tile(x_emb[None], (b, 1, 1, 1, 1))            # (b, t, w, w, npf)
    x_emb = jnp.transpose(x_emb, (0, 4, 1, 2, 3))             # (b, npf, t, w, w)

    y_emb = row_w[j]                                          # (h, npf)
    y_emb = jnp.tile(y_emb[None, :, :], (h, 1, 1))            # (h, h, npf)
    y_emb = jnp.tile(y_emb[None], (t, 1, 1, 1))               # (t, h, h, npf)
    y_emb = jnp.tile(y_emb[None], (b, 1, 1, 1, 1))            # (b, t, h, h, npf)
    y_emb = jnp.transpose(y_emb, (0, 4, 1, 2, 3))             # (b, npf, t, h, h)

    t_emb = temp_w[k]                                         # (t, npf)
    t_emb = jnp.tile(t_emb[:, None, :], (1, w, 1))            # (t, w, npf)
    t_emb = jnp.tile(t_emb[:, None, :, :], (1, h, 1, 1))      # (t, h, w, npf)
    t_emb = jnp.tile(t_emb[None], (b, 1, 1, 1, 1))            # (b, t, h, w, npf)

    pos = jnp.concatenate([x_emb, y_emb, t_emb], axis=1)
    return pos


# ----------------------------------------------------------------------------
if __name__ == "__main__":
    # Original forward requires t == h == w == num_pos_feats for torch.cat to work.
    b, d, t, h, w = 2, 4, 8, 8, 8
    npf = 8

    key = jax.random.PRNGKey(0)
    kx, kr, kc, kt = jax.random.split(key, 4)
    x = jax.random.normal(kx, (b, d, t, h, w), dtype=jnp.float32)
    # nn.init.uniform_ -> U[0, 1)
    row_w = jax.random.uniform(kr, (50, npf), dtype=jnp.float32)
    col_w = jax.random.uniform(kc, (50, npf), dtype=jnp.float32)
    temp_w = jax.random.uniform(kt, (20, npf), dtype=jnp.float32)

    pos = position_embedding_learned_pallas(x, col_w, row_w, temp_w)
    pos = jax.block_until_ready(pos)

    ref = position_embedding_learned_ref(x, col_w, row_w, temp_w)

    assert pos.shape == (b, 2 * npf + t, t, h, w), pos.shape
    assert pos.shape == ref.shape
    assert jnp.allclose(pos, ref, rtol=1e-6, atol=1e-6)
    print("KERNEL_OK")
</pallas_src>

<mosaic_0001>
module attributes {stable_mosaic.version = 11 : i64} {
  func.func @_pos_broadcast_kernel(%arg0: i32, %arg1: i32, %arg2: memref<24x512xf32, #tpu.memory_space<vmem>>, %arg3: memref<1x24x512xf32, #tpu.memory_space<vmem>>) attributes {dimension_semantics = [#tpu.dimension_semantics<parallel>, #tpu.dimension_semantics<parallel>], iteration_bounds = array<i64: 1, 2>, scalar_prefetch = 0 : i64, scratch_operands = 0 : i64, tpu.core_type = #tpu.core_type<tc>, window_params = [{transform_indices = @transform_0, window_bounds = array<i64: 24, 512>}, {transform_indices = @transform_1, window_bounds = array<i64: 1, 24, 512>}]} {
    %c0 = arith.constant 0 : index
    %c0_0 = arith.constant 0 : index
    %0 = vector.load %arg2[%c0, %c0_0] : memref<24x512xf32, #tpu.memory_space<vmem>>, vector<24x512xf32>
    %c0_1 = arith.constant 0 : index
    %c0_2 = arith.constant 0 : index
    %c0_3 = arith.constant 0 : index
    %1 = vector.load %arg3[%c0_1, %c0_2, %c0_3] : memref<1x24x512xf32, #tpu.memory_space<vmem>>, vector<1x24x512xf32>
    %2 = vector.shape_cast %1 : vector<1x24x512xf32> to vector<24x512xf32>
    %3 = vector.shape_cast %0 : vector<24x512xf32> to vector<1x24x512xf32>
    tpu.vector_store %arg3[%c0_1, %c0_2, %c0_3], %3 {strides = array<i32>} : memref<1x24x512xf32, #tpu.memory_space<vmem>>, vector<1x24x512xf32>,
    return
  }
  func.func @transform_0(%arg0: i32, %arg1: i32) -> (i32, i32) {
    %c0_i32 = arith.constant 0 : i32
    %c0_i32_0 = arith.constant 0 : i32
    return %c0_i32, %arg0 : i32, i32
  }
  func.func @transform_1(%arg0: i32, %arg1: i32) -> (i32, i32, i32) {
    %c0_i32 = arith.constant 0 : i32
    %c0_i32_0 = arith.constant 0 : i32
    return %arg1, %c0_i32, %arg0 : i32, i32, i32
  }
}

</mosaic_0001>

<llo_original>
// kernel: tpu_custom_call.1
$region0: #{tpu_custom_call.1}
  #allocation0 [shape = 'u32[]', space=smem, size = 0x4, offset = 0x4, fixed_abs, tag = 'smem constant byte address 0x4 - core index']
  #allocation1 [shape = 'u32[144,128]{1,0:T(1,128)}', space=vmem, size = 0x12000, scoped, tag = 'internal scratch']
  %s0 = inlined_call_operand.hbm [shape: f32[24,512], index: 0, kind: input, shape index: {}]
  %s1 = inlined_call_operand.hbm [shape: f32[2,24,512], index: 1, kind: output, shape index: {}]
  %s2 = sld [smem:[#allocation0]]
  $region41: #{tpu_custom_call.1} parent=0
    _
  %s4 = ssub.s32 1, %s2
  %s5 = scalar_select 0, %s4, %s2
  $region1: #{tpu_custom_call.1} parent=0
    #allocation2 [shape = 'u8[49152]{0}', space=vmem, size = 0xc000, scoped, tag = 'input window, operand 0, single buffered']
    #allocation3 [shape = 's32[2]{0}', space=sflag, size = 0x8, scoped, tag = 'scoped memory for tpu_custom_call.1']
    #allocation4 [shape = 's32[2]{0}', space=sflag, size = 0x8, scoped, tag = 'scoped memory for tpu_custom_call.1']
    #allocation5 [shape = 'u8[98304]{0}', space=vmem, size = 0x18000, scoped, tag = 'output window, operand 0']
    %6 = vsyncpa [#allocation3], 0
    %7 = vsyncpa [#allocation4], 0
    %s8 = scalar_lea.sflag [#allocation4], 1
    %9 = vsyncpa %s8, 0
    loop: start=0, step=1, limit=4
    $region2: #{tpu_custom_call.1} parent=1 // loop_pre_header
      _
    $region3: #{tpu_custom_call.1} parent=1 // loop_header
      %s11 = sphi 0, %s15
      %p12 = scmp.ge.s32.totalorder %s11, 4
      %s18 = sphi 0, %s30
      %s19 = sphi 0, %s26
      %s20 = sphi 0, %s18
      %s21 = sphi 0, %s19
      %s22 = sphi 0, %s20
      %s23 = sphi 0, %s21
      %s33 = sphi 0, %s35
      %s36 = sphi 0, %s33
      %s37 = sphi 0, %s36
      %s53 = sphi 0, %s37
      %s61 = sphi 0, %s63
      %s64 = sphi 0, %s61
      %s65 = sphi 0, %s64
      %s81 = sphi 0, %s65
    $region4: #{tpu_custom_call.1} parent=1 // loop_header_branch
      %14 = sbr.rel (%p12) target = $region8
    $region5: #{tpu_custom_call.1} parent=1 // loop_body
      %s16 = ssub.s32 %s11, 1
      %s17 = ssub.s32 %s11, 2
      %s24 = sadd.s32 1, %s19
      %p25 = scmp.ge.s32.totalorder %s24, 2
      %s26 = scalar_select %p25, 0, %s24
      %s27 = sadd.s32 1, %s18
      %s28 = scalar_select %p25, %s27, %s18
      %p29 = scmp.ge.s32.totalorder %s28, 1
      %s30 = scalar_select %p29, 0, %s28
      %s31 = ssub.s32 %s18, %s30
      %p32 = scmp.eq.s32.totalorder %s31, 0
      %s34 = sadd.s32 %s33, 1
      %s35 = scalar_select %p32, %s33, %s34
      %p38 = pneg %p32
      %p39 = scmp.eq.s32.totalorder %s11, 1
      %p40 = por %p38, %p39
      %p41 = scmp.ne.s32.totalorder %s33, %s36
      %p42 = scmp.eq.s32.totalorder %s11, 0
      %p43 = por %p41, %p42
      %p44 = scmp.ne.s32.totalorder %s33, %s36
      %p45 = scmp.eq.s32.totalorder %s16, 1
      %p46 = por %p44, %p45
      %p47 = scmp.ne.s32.totalorder %s36, %s37
      %p48 = scmp.eq.s32.totalorder %s16, 0
      %p49 = por %p47, %p48
      %p50 = scmp.ne.s32.totalorder %s36, %s37
      %p51 = scmp.eq.s32.totalorder %s17, 1
      %p52 = por %p50, %p51
      %p54 = scmp.ne.s32.totalorder %s37, %s53
      %p55 = scmp.eq.s32.totalorder %s17, 0
      %p56 = por %p54, %p55
      %s57 = ssub.s32 %s19, %s26
      %s58 = ssub.s32 %s18, %s30
      %s59 = sor.u32 %s57, %s58
      %p60 = scmp.eq.s32.totalorder %s59, 0
      %s62 = sadd.s32 %s61, 1
      %s63 = scalar_select %p60, %s61, %s62
      %p66 = pneg %p60
      %p67 = scmp.eq.s32.totalorder %s11, 1
      %p68 = por %p66, %p67
      %p69 = scmp.ne.s32.totalorder %s61, %s64
      %p70 = scmp.eq.s32.totalorder %s11, 0
      %p71 = por %p69, %p70
      %p72 = scmp.ne.s32.totalorder %s61, %s64
      %p73 = scmp.eq.s32.totalorder %s16, 1
      %p74 = por %p72, %p73
      %p75 = scmp.ne.s32.totalorder %s64, %s65
      %p76 = scmp.eq.s32.totalorder %s16, 0
      %p77 = por %p75, %p76
      %p78 = scmp.ne.s32.totalorder %s64, %s65
      %p79 = scmp.eq.s32.totalorder %s17, 1
      %p80 = por %p78, %p79
      %p82 = scmp.ne.s32.totalorder %s65, %s81
      %p83 = scmp.eq.s32.totalorder %s17, 0
      %p84 = por %p82, %p83
      %p85 = scmp.le.s32.totalorder 1, %s11
      %p86 = scmp.lt.s32.totalorder %s11, 3
      %p87 = pnand %p85, %p86
      %p88 = pneg %p87
      // Predicated region
      $region9: #{tpu_custom_call.1} parent=5 // pred_check
        _
      $region10: #{tpu_custom_call.1} parent=5 // pred_check_branch
        %90 = sbr.rel (%p87) target = $region12
      $region11: #{tpu_custom_call.1} parent=5 // pred_region
        %s91 = ssub.s32 %s11, 1
        // Predicated region
        $region13: #{tpu_custom_call.1} parent=11 // pred_check
          %p92 = pneg %p49
        $region14: #{tpu_custom_call.1} parent=11 // pred_check_branch
          %94 = sbr.rel (%p92) target = $region16
        $region15: #{tpu_custom_call.1} parent=11 // pred_region
          %s95 = smul.u32 4, %s20
          %s97 = ssub.s32 1536, 1536
          %98 = vsyncadd [#allocation3], %s97
          %s99 = smul.addr %s95, 128
          %s100 = scalar_lea.hbm %s0, %s99
          %s101 = sshll.u32 [#allocation2], 4
          %s102 = int_to_ptr.vmem [resolvable:$true] %s101
          %107 = dma.hbm_to_vmem [thread:$0]  %s100, 1536, %s102, [#allocation3], 512, 512, 32
        $region16: #{tpu_custom_call.1} parent=11 // pred_fallthru
          _
      $region12: #{tpu_custom_call.1} parent=5 // pred_fallthru
        _
      %p108 = scmp.lt.s32.totalorder %s11, 2
      // Predicated region
      $region17: #{tpu_custom_call.1} parent=5 // pred_check
        %p109 = pneg %p108
      $region18: #{tpu_custom_call.1} parent=5 // pred_check_branch
        %111 = sbr.rel (%p109) target = $region20
      $region19: #{tpu_custom_call.1} parent=5 // pred_region
        _
      $region20: #{tpu_custom_call.1} parent=5 // pred_fallthru
        _
      %p112 = scmp.le.s32.totalorder 1, %s11
      %p113 = scmp.lt.s32.totalorder %s11, 3
      %p114 = pnand %p112, %p113
      %p115 = pneg %p114
      // Predicated region
      $region21: #{tpu_custom_call.1} parent=5 // pred_check
        _
      $region22: #{tpu_custom_call.1} parent=5 // pred_check_branch
        %117 = sbr.rel (%p114) target = $region24
      $region23: #{tpu_custom_call.1} parent=5 // pred_region
        %s118 = ssub.s32 %s11, 1
        // Predicated region
        $region25: #{tpu_custom_call.1} parent=23 // pred_check
          %p119 = pneg %p49
        $region26: #{tpu_custom_call.1} parent=23 // pred_check_branch
          %121 = sbr.rel (%p119) target = $region28
        $region27: #{tpu_custom_call.1} parent=23 // pred_region
          %122 = dma.done [#allocation3], 1536
        $region28: #{tpu_custom_call.1} parent=23 // pred_fallthru
          _
        %p123 = pneg %p49
        %p124 = pneg %p46
        %p125 = pneg %p77
        %p126 = pneg %p74
        %s127 = sand.u32 %s64, 1
        %s128 = scalar_lea.sflag [#allocation4], %s127
        %s129 = sand.u32 %s64, 1
        %s130 = smul.addr %s129, 96
        %s131 = scalar_lea.vmem [#allocation5], %s130
        %s132 = smul.u32 4, %s20
        %s133 = smul.u32 4, %s20
        %v134 = vld [vmem:[#allocation2] sm:$0xff]
        %v135 = vld [vmem:[#allocation2 + $0x8] sm:$0xff]
        %v136 = vld [vmem:[#allocation2 + $0x10] sm:$0xff]
        %v137 = vld [vmem:[#allocation2 + $0x18] sm:$0xff]
        %v138 = vld [vmem:[#allocation2 + $0x20] sm:$0xff]
        %v139 = vld [vmem:[#allocation2 + $0x28] sm:$0xff]
        %v140 = vld [vmem:[#allocation2 + $0x30] sm:$0xff]
        %v141 = vld [vmem:[#allocation2 + $0x38] sm:$0xff]
        %v142 = vld [vmem:[#allocation2 + $0x40] sm:$0xff]
        %v143 = vld [vmem:[#allocation2 + $0x48] sm:$0xff]
        %v144 = vld [vmem:[#allocation2 + $0x50] sm:$0xff]
        %v145 = vld [vmem:[#allocation2 + $0x58] sm:$0xff]
        %146 = vst [vmem:[%s131] sm:$0xff] %v134
        %147 = vst [vmem:[%s131 + $0x8] sm:$0xff] %v135
        %148 = vst [vmem:[%s131 + $0x10] sm:$0xff] %v136
        %149 = vst [vmem:[%s131 + $0x18] sm:$0xff] %v137
        %150 = vst [vmem:[%s131 + $0x20] sm:$0xff] %v138
        %151 = vst [vmem:[%s131 + $0x28] sm:$0xff] %v139
        %152 = vst [vmem:[%s131 + $0x30] sm:$0xff] %v140
        %153 = vst [vmem:[%s131 + $0x38] sm:$0xff] %v141
        %154 = vst [vmem:[%s131 + $0x40] sm:$0xff] %v142
        %155 = vst [vmem:[%s131 + $0x48] sm:$0xff] %v143
        %156 = vst [vmem:[%s131 + $0x50] sm:$0xff] %v144
        %157 = vst [vmem:[%s131 + $0x58] sm:$0xff] %v145
        %s158 = sand.u32 %s64, 1
        %s159 = scalar_lea.sflag [#allocation4], %s158
        %s160 = sand.u32 %s64, 1
        %s161 = smul.addr %s160, 96
        %s162 = scalar_lea.vmem [#allocation5], %s161
        // Predicated region
        $region29: #{tpu_custom_call.1} parent=23 // pred_check
          %p163 = pneg %p74
        $region30: #{tpu_custom_call.1} parent=23 // pred_check_branch
          %165 = sbr.rel (%p163) target = $region32
        $region31: #{tpu_custom_call.1} parent=23 // pred_region
          %s166 = smul.u32 4, %s20
          %s168 = ssub.s32 1536, 1536
          %169 = vsyncadd %s159, %s168
          %s170 = smul.addr %s21, 12
          %s171 = sadd.s32 %s166, %s170
          %s172 = smul.addr %s171, 128
          %s173 = scalar_lea.hbm %s1, %s172
          %s174 = sshll.u32 %s162, 4
          %s175 = int_to_ptr.vmem [resolvable:$true] %s174
          %180 = dma.vmem_to_hbm [thread:$0]  %s175, 1536, %s173, %s159, 512, 512, 32
        $region32: #{tpu_custom_call.1} parent=23 // pred_fallthru
          _
      $region24: #{tpu_custom_call.1} parent=5 // pred_fallthru
        _
      %p181 = scmp.le.s32.totalorder 2, %s11
      // Predicated region
      $region33: #{tpu_custom_call.1} parent=5 // pred_check
        %p182 = pneg %p181
      $region34: #{tpu_custom_call.1} parent=5 // pred_check_branch
        %184 = sbr.rel (%p182) target = $region36
      $region35: #{tpu_custom_call.1} parent=5 // pred_region
        %s185 = ssub.s32 %s11, 2
        // Predicated region
        $region37: #{tpu_custom_call.1} parent=35 // pred_check
          %p186 = pneg %p80
        $region38: #{tpu_custom_call.1} parent=35 // pred_check_branch
          %188 = sbr.rel (%p186) target = $region40
        $region39: #{tpu_custom_call.1} parent=35 // pred_region
          %s189 = sand.u32 %s65, 1
          %s190 = scalar_lea.sflag [#allocation4], %s189
          %s191 = sand.u32 %s65, 1
          %s192 = smul.addr %s191, 96
          %s193 = scalar_lea.vmem [#allocation5], %s192
          %194 = dma.done %s190, 1536
        $region40: #{tpu_custom_call.1} parent=35 // pred_fallthru
          _
      $region36: #{tpu_custom_call.1} parent=5 // pred_fallthru
        _
    $region6: #{tpu_custom_call.1} parent=1 // loop_footer
      %s15 = sadd.s32 1, %s11
    $region7: #{tpu_custom_call.1} parent=1 // loop_footer_branch
      %10 = sbr.rel target = $region3
    $region8: #{tpu_custom_call.1} parent=1 // loop_exit
      _
    %195 = vsyncpa [#allocation3], 1
    %s196 = scalar_lea.sflag [#allocation3], 1
    %197 = vsyncpa %s196, 1
    %198 = vsyncpa [#allocation4], 1
    %s199 = scalar_lea.sflag [#allocation4], 1
    %200 = vsyncpa %s199, 1

</llo_original>
